<compile_context>
chip_gen: v5e
topology: v5e:2x2
jax: 0.10.0
libtpu: 0.0.40
codegen_flags: <defaults>
</compile_context>

<pallas_src>
import jax
import jax.numpy as jnp
from jax.experimental import pallas as pl
from jax.experimental.pallas import tpu as pltpu

_SUB = 8                       # sublanes of one f32 vreg
_LANES = 128                   # lanes of one vreg
_SLAB = _SUB * _LANES          # 1024 values per (8, 128) slab
_MAX_SLABS_PER_STEP = 64       # <= 256 KiB of f32 moved per grid step


def _accum_kernel(n_ref, vals_ref, sum_ref, cnt_ref, sum_out_ref, cnt_out_ref):
    """One grid step: add a dense (8, tile) value chunk into the resident
    (8, 128) partial-sum accumulator; fold the true batch count once."""
    step = pl.program_id(0)

    @pl.when(step == 0)
    def _():
        # Seed the resident accumulator with the previous running state and
        # bump the count by the *real* (unpadded) batch size from SMEM.
        sum_out_ref[...] = sum_ref[...]
        cnt_out_ref[0, 0] = cnt_ref[0, 0] + n_ref[0, 0]

    acc = sum_out_ref[...]                                  # (8, 128) f32
    cols = vals_ref.shape[1]
    # Static unrolled loop of full-vreg adds; slices of a VMEM ref are free.
    for c in range(cols // _LANES):
        acc = acc + vals_ref[:, c * _LANES:(c + 1) * _LANES]
    sum_out_ref[...] = acc


def _accumulate_impl(n_arr, vals, sum_state, cnt_state):
    """vals: (8, k*128) f32 zero-padded batch; n_arr: (1,1) f32 true count;
    sum_state: (8, 128) f32 partial sums; cnt_state: (1,1) f32 count."""
    total_slabs = vals.shape[1] // _LANES
    slabs_per_step = min(total_slabs, _MAX_SLABS_PER_STEP)
    tile = slabs_per_step * _LANES
    n_steps = vals.shape[1] // tile

    return pl.pallas_call(
        _accum_kernel,
        out_shape=(
            jax.ShapeDtypeStruct(sum_state.shape, sum_state.dtype),
            jax.ShapeDtypeStruct(cnt_state.shape, cnt_state.dtype),
        ),
        grid=(n_steps,),
        in_specs=[
            pl.BlockSpec(memory_space=pltpu.MemorySpace.SMEM),     # true count
            pl.BlockSpec((_SUB, tile), lambda i: (0, i)),          # value chunk
            pl.BlockSpec((_SUB, _LANES), lambda i: (0, 0)),        # prev sums
            pl.BlockSpec(memory_space=pltpu.MemorySpace.SMEM),     # prev count
        ],
        out_specs=(
            pl.BlockSpec((_SUB, _LANES), lambda i: (0, 0)),        # new sums (resident accumulator)
            pl.BlockSpec(memory_space=pltpu.MemorySpace.SMEM),     # new count
        ),
        # Update the running state in place.
        input_output_aliases={2: 0, 3: 1},
        compiler_params=pltpu.CompilerParams(
            dimension_semantics=("arbitrary",)),
    )(n_arr, vals, sum_state, cnt_state)


# Donate the state buffers so input_output_aliases actually elides the copy.
_accumulate = jax.jit(_accumulate_impl, donate_argnums=(2, 3))


def _bucket_slabs(n):
    """Number of 1024-value slabs, bucketed to powers of two (limits retraces)."""
    return max(1, pl.next_power_of_2(pl.cdiv(n, _SLAB)))


class StepMetricPallas:
    """Pallas-backed StepMetric: call() accumulates, result() = running mean."""

    def __init__(self, name, dtype=jnp.float32, prefix='Metrics'):
        self.name = name
        self._dtype = dtype
        self._prefix = prefix
        self.reset()

    def __call__(self, *args, **kwargs):
        return self.call(*args, **kwargs)

    def call(self, values):
        """Accumulates a mini-batch of scalar metric values (any shape)."""
        vals = jnp.asarray(values, jnp.float32).reshape(-1)
        n = int(vals.shape[0])
        n_slabs = _bucket_slabs(n)
        padded = n_slabs * _SLAB
        if padded != n:
            vals = jnp.pad(vals, (0, padded - n))          # zero tail: sum-safe
        vals = vals.reshape(_SUB, n_slabs * _LANES)        # lane/sublane dense
        n_arr = jnp.full((1, 1), n, jnp.float32)
        self._sum, self._cnt = _accumulate(n_arr, vals, self._sum, self._cnt)
        return self._sum, self._cnt

    def forward(self, *args, **kwargs):
        # StepMetric.forward is `pass` -> no compute, returns None.
        pass

    def reset(self):
        self._sum = jnp.zeros((_SUB, _LANES), jnp.float32)
        self._cnt = jnp.zeros((1, 1), jnp.float32)

    def result(self):
        # Single cross-lane/sublane reduce, done once in plain JAX.
        total = jnp.sum(self._sum)
        count = self._cnt[0, 0]
        return jnp.where(count > 0, total / count, jnp.float32(0.0)).astype(self._dtype)


if __name__ == "__main__":
    key = jax.random.PRNGKey(0)
    k1, k2, k3 = jax.random.split(key, 3)
    batch1 = jax.random.normal(k1, (8,), dtype=jnp.float32)   # B=8
    batch2 = jax.random.normal(k2, (8,), dtype=jnp.float32)   # same bucket -> no retrace
    batch3 = jax.random.normal(k3, (5,), dtype=jnp.float32)   # exercises padding + true-count path

    metric = StepMetricPallas(name="AverageReturn", dtype=jnp.float32)
    metric(batch1)
    metric(batch2)
    metric(batch3)
    res = metric.result()
    jax.block_until_ready(res)

    expected = jnp.mean(jnp.concatenate([batch1, batch2, batch3]))
    assert jnp.allclose(res, expected, atol=1e-5), (res, expected)

    # forward() is the abstract no-op
    assert metric.forward(batch1) is None

    # reset() clears the running state
    metric.reset()
    assert float(metric.result()) == 0.0

    print("KERNEL_OK")
</pallas_src>

<mosaic_0001>
module attributes {stable_mosaic.version = 11 : i64} {
  func.func @_accum_kernel(%arg0: i32, %arg1: memref<1x1xf32, #tpu.memory_space<smem>>, %arg2: memref<8x128xf32, #tpu.memory_space<vmem>>, %arg3: memref<8x128xf32, #tpu.memory_space<vmem>>, %arg4: memref<1x1xf32, #tpu.memory_space<smem>>, %arg5: memref<8x128xf32, #tpu.memory_space<vmem>>, %arg6: memref<1x1xf32, #tpu.memory_space<smem>>) attributes {dimension_semantics = [#tpu.dimension_semantics<arbitrary>], iteration_bounds = array<i64: 1>, scalar_prefetch = 0 : i64, scratch_operands = 0 : i64, tpu.core_type = #tpu.core_type<tc>, window_params = [{transform_indices = @transform_0, window_bounds = array<i64: 1, 1>}, {transform_indices = @transform_1, window_bounds = array<i64: 8, 128>}, {pipeline_mode = #tpu.pipeline_mode<synchronous>, transform_indices = @transform_2, window_bounds = array<i64: 8, 128>}, {transform_indices = @transform_3, window_bounds = array<i64: 1, 1>}, {pipeline_mode = #tpu.pipeline_mode<synchronous>, transform_indices = @transform_4, window_bounds = array<i64: 8, 128>}, {transform_indices = @transform_5, window_bounds = array<i64: 1, 1>}]} {
    %c0_i32 = arith.constant 0 : i32
    %0 = arith.cmpi eq, %arg0, %c0_i32 : i32
    %1 = arith.extui %0 : i1 to i32
    %c0_i32_0 = arith.constant 0 : i32
    %2 = arith.cmpi ne, %1, %c0_i32_0 : i32
    scf.if %2 {
      %c0_6 = arith.constant 0 : index
      %c0_7 = arith.constant 0 : index
      %7 = vector.load %arg3[%c0_6, %c0_7] : memref<8x128xf32, #tpu.memory_space<vmem>>, vector<8x128xf32>
      %c0_8 = arith.constant 0 : index
      %c0_9 = arith.constant 0 : index
      %8 = vector.load %arg5[%c0_8, %c0_9] : memref<8x128xf32, #tpu.memory_space<vmem>>, vector<8x128xf32>
      tpu.vector_store %arg5[%c0_8, %c0_9], %7 {strides = array<i32>} : memref<8x128xf32, #tpu.memory_space<vmem>>, vector<8x128xf32>,
      %c0_10 = arith.constant 0 : index
      %c0_11 = arith.constant 0 : index
      %9 = memref.load %arg4[%c0_10, %c0_11] : memref<1x1xf32, #tpu.memory_space<smem>>
      %c0_12 = arith.constant 0 : index
      %c0_13 = arith.constant 0 : index
      %10 = memref.load %arg1[%c0_12, %c0_13] : memref<1x1xf32, #tpu.memory_space<smem>>
      %11 = arith.addf %9, %10 : f32
      %c0_14 = arith.constant 0 : index
      %c0_15 = arith.constant 0 : index
      %12 = memref.load %arg6[%c0_14, %c0_15] : memref<1x1xf32, #tpu.memory_space<smem>>
      memref.store %11, %arg6[%c0_14, %c0_15] : memref<1x1xf32, #tpu.memory_space<smem>>
    } else {
    }
    %c0 = arith.constant 0 : index
    %c0_1 = arith.constant 0 : index
    %3 = vector.load %arg5[%c0, %c0_1] : memref<8x128xf32, #tpu.memory_space<vmem>>, vector<8x128xf32>
    %c0_2 = arith.constant 0 : index
    %c0_3 = arith.constant 0 : index
    %4 = vector.load %arg2[%c0_2, %c0_3] : memref<8x128xf32, #tpu.memory_space<vmem>>, vector<8x128xf32>
    %5 = arith.addf %3, %4 : vector<8x128xf32>
    %c0_4 = arith.constant 0 : index
    %c0_5 = arith.constant 0 : index
    %6 = vector.load %arg5[%c0_4, %c0_5] : memref<8x128xf32, #tpu.memory_space<vmem>>, vector<8x128xf32>
    tpu.vector_store %arg5[%c0_4, %c0_5], %5 {strides = array<i32>} : memref<8x128xf32, #tpu.memory_space<vmem>>, vector<8x128xf32>,
    return
  }
  func.func @transform_0(%arg0: i32) -> (i32, i32) {
    %c0_i32 = arith.constant 0 : i32
    %c0_i32_0 = arith.constant 0 : i32
    %c0_i32_1 = arith.constant 0 : i32
    return %c0_i32, %c0_i32_0 : i32, i32
  }
  func.func @transform_1(%arg0: i32) -> (i32, i32) {
    %c0_i32 = arith.constant 0 : i32
    %c0_i32_0 = arith.constant 0 : i32
    return %c0_i32, %arg0 : i32, i32
  }
  func.func @transform_2(%arg0: i32) -> (i32, i32) {
    %c0_i32 = arith.constant 0 : i32
    %c0_i32_0 = arith.constant 0 : i32
    %c0_i32_1 = arith.constant 0 : i32
    return %c0_i32, %c0_i32_0 : i32, i32
  }
  func.func @transform_3(%arg0: i32) -> (i32, i32) {
    %c0_i32 = arith.constant 0 : i32
    %c0_i32_0 = arith.constant 0 : i32
    %c0_i32_1 = arith.constant 0 : i32
    return %c0_i32, %c0_i32_0 : i32, i32
  }
  func.func @transform_4(%arg0: i32) -> (i32, i32) {
    %c0_i32 = arith.constant 0 : i32
    %c0_i32_0 = arith.constant 0 : i32
    %c0_i32_1 = arith.constant 0 : i32
    return %c0_i32, %c0_i32_0 : i32, i32
  }
  func.func @transform_5(%arg0: i32) -> (i32, i32) {
    %c0_i32 = arith.constant 0 : i32
    %c0_i32_0 = arith.constant 0 : i32
    %c0_i32_1 = arith.constant 0 : i32
    return %c0_i32, %c0_i32_0 : i32, i32
  }
}

</mosaic_0001>

<llo_original>
// kernel: _accumulate_impl.1
$region0: #{_accumulate_impl.1}
  #allocation0 [shape = 'u32[]', space=smem, size = 0x4, offset = 0x4, fixed_abs, tag = 'smem constant byte address 0x4 - core index']
  #allocation1 [shape = 'u32[72,128]{1,0:T(1,128)}', space=vmem, size = 0x9000, scoped, tag = 'internal scratch']
  #allocation2 [shape = 'f32[1,1]{1,0:T(1,128)S(6)}', space=smem, size = 0x200, scoped, tag = 'scoped memory for _accumulate_impl.1']
  #allocation3 [shape = 'f32[1,1]{1,0:T(1,128)S(6)}', space=smem, size = 0x200, scoped, tag = 'scoped memory for _accumulate_impl.1']
  %s0 = inlined_call_operand.<no memory space> [shape: f32[1,1], index: 0, kind: input, shape index: {}]
  %s1 = inlined_call_operand.vmem [shape: f32[8,128], index: 1, kind: input, shape index: {}]
  %s2 = inlined_call_operand.hbm [shape: f32[8,128], index: 2, kind: input, shape index: {}, may-alias: {2,4}]
  %s3 = inlined_call_operand.<no memory space> [shape: f32[1,1], index: 3, kind: input, shape index: {}, may-alias: {3,5}]
  %s4 = inlined_call_operand.hbm [shape: f32[8,128], index: 4, kind: output, shape index: {0}, may-alias: {2,4}]
  %s5 = inlined_call_operand.hbm [shape: f32[1,1], index: 5, kind: output, shape index: {1}, may-alias: {3,5}]
  %6 = xla_tuple %s4, %s5
  %s7 = sld [smem:[#allocation0]]
  $region42: #{_accumulate_impl.1} parent=0
    _
  %s9 = ssub.s32 1, %s7
  %s10 = scalar_select 0, %s9, %s7
  %11 = sst [smem:[#allocation2]] %s0
  %12 = sst [smem:[#allocation3]] %s3
  $region1: #{_accumulate_impl.1} parent=0
    #allocation4 [shape = 'u8[4096]{0}', space=vmem, size = 0x1000, scoped, tag = 'input window, operand 2, single buffered']
    #allocation5 [shape = 's32[1]{0}', space=sflag, size = 0x4, scoped, tag = 'scoped memory for _accumulate_impl.1']
    #allocation6 [shape = 's32[1]{0}', space=sflag, size = 0x4, scoped, tag = 'scoped memory for _accumulate_impl.1']
    #allocation7 [shape = 's32[1]{0}', space=sflag, size = 0x4, scoped, tag = 'scoped memory for _accumulate_impl.1']
    #allocation8 [shape = 'u8[4096]{0}', space=vmem, size = 0x1000, scoped, tag = 'output window, operand 0, single buffered']
    #allocation9 [shape = 'u8[512]{0}', space=smem, size = 0x200, scoped, tag = 'output window, operand 1, single buffered']
    %13 = vsyncpa [#allocation5], 0
    %14 = vsyncpa [#allocation6], 0
    %15 = vsyncpa [#allocation7], 0
    // Predicated region
    $region2: #{_accumulate_impl.1} parent=1 // pred_check
      _
    $region3: #{_accumulate_impl.1} parent=1 // pred_check_branch
      %17 = sbr.rel (0) target = $region5
    $region4: #{_accumulate_impl.1} parent=1 // pred_region
      _
    $region5: #{_accumulate_impl.1} parent=1 // pred_fallthru
      _
    // Predicated region
    $region6: #{_accumulate_impl.1} parent=1 // pred_check
      _
    $region7: #{_accumulate_impl.1} parent=1 // pred_check_branch
      %19 = sbr.rel (0) target = $region9
    $region8: #{_accumulate_impl.1} parent=1 // pred_region
      _
    $region9: #{_accumulate_impl.1} parent=1 // pred_fallthru
      _
    // Predicated region
    $region10: #{_accumulate_impl.1} parent=1 // pred_check
      _
    $region11: #{_accumulate_impl.1} parent=1 // pred_check_branch
      %21 = sbr.rel (0) target = $region13
    $region12: #{_accumulate_impl.1} parent=1 // pred_region
      %23 = vsyncadd [#allocation5], 0
      %s25 = sshll.u32 %s2, 4
      %s26 = int_to_ptr.hbm [resolvable:$true] %s25
      %s27 = sshll.u32 [#allocation4], 4
      %s28 = int_to_ptr.vmem [resolvable:$true] %s27
      %30 = dma.hbm_to_vmem [thread:$0]  %s26, 128, %s28, [#allocation5]
    $region13: #{_accumulate_impl.1} parent=1 // pred_fallthru
      _
    // Predicated region
    $region14: #{_accumulate_impl.1} parent=1 // pred_check
      _
    $region15: #{_accumulate_impl.1} parent=1 // pred_check_branch
      %32 = sbr.rel (0) target = $region17
    $region16: #{_accumulate_impl.1} parent=1 // pred_region
      _
    $region17: #{_accumulate_impl.1} parent=1 // pred_fallthru
      _
    // Predicated region
    $region18: #{_accumulate_impl.1} parent=1 // pred_check
      _
    $region19: #{_accumulate_impl.1} parent=1 // pred_check_branch
      %34 = sbr.rel (0) target = $region21
    $region20: #{_accumulate_impl.1} parent=1 // pred_region
      %36 = dma.done [#allocation5], 128
    $region21: #{_accumulate_impl.1} parent=1 // pred_fallthru
      _
    %p37 = scmp.eq.s32.totalorder 0, 0
    // Predicated region
    $region22: #{_accumulate_impl.1} parent=1 // pred_check
      %p38 = pneg %p37
    $region23: #{_accumulate_impl.1} parent=1 // pred_check_branch
      %40 = sbr.rel (%p38) target = $region25
    $region24: #{_accumulate_impl.1} parent=1 // pred_region
      %v41 = vld [vmem:[#allocation4] sm:$0xff]
      %42 = vst [vmem:[#allocation8] sm:$0xff] %v41
      %s43 = sld [smem:[#allocation3]]
      %s44 = sld [smem:[#allocation2]]
      %s45 = sadd.f32 %s43, %s44
      %s46 = scalar_lea.smem [#allocation9], 0
      %47 = sst [smem:[%s46]] %s45
    $region25: #{_accumulate_impl.1} parent=1 // pred_fallthru
      _
    %v48 = vld [vmem:[#allocation8] sm:$0xff]
    %v49 = vld [vmem:[%s1] sm:$0xff]
    %v50 = vadd.f32 %v48, %v49
    %51 = vst [vmem:[#allocation8] sm:$0xff] %v50
    // Predicated region
    $region26: #{_accumulate_impl.1} parent=1 // pred_check
      _
    $region27: #{_accumulate_impl.1} parent=1 // pred_check_branch
      %53 = sbr.rel (0) target = $region29
    $region28: #{_accumulate_impl.1} parent=1 // pred_region
      %55 = vsyncadd [#allocation6], 0
      %s57 = sshll.u32 [#allocation8], 4
      %s58 = int_to_ptr.vmem [resolvable:$true] %s57
      %s59 = sshll.u32 %s4, 4
      %s60 = int_to_ptr.hbm [resolvable:$true] %s59
      %62 = dma.vmem_to_hbm [thread:$0]  %s58, 128, %s60, [#allocation6]
    $region29: #{_accumulate_impl.1} parent=1 // pred_fallthru
      _
    // Predicated region
    $region30: #{_accumulate_impl.1} parent=1 // pred_check
      _
    $region31: #{_accumulate_impl.1} parent=1 // pred_check_branch
      %64 = sbr.rel (0) target = $region33
    $region32: #{_accumulate_impl.1} parent=1 // pred_region
      %66 = vsyncadd [#allocation7], 0
      %s68 = sshll.u32 %s5, 4
      %s69 = int_to_ptr.hbm [resolvable:$true] %s68
      %71 = dma.smem_to_hbm [#allocation9], 16, %s69, [#allocation7]
    $region33: #{_accumulate_impl.1} parent=1 // pred_fallthru
      _
    // Predicated region
    $region34: #{_accumulate_impl.1} parent=1 // pred_check
      _
    $region35: #{_accumulate_impl.1} parent=1 // pred_check_branch
      %73 = sbr.rel (0) target = $region37
    $region36: #{_accumulate_impl.1} parent=1 // pred_region
      %75 = dma.done [#allocation6], 128
    $region37: #{_accumulate_impl.1} parent=1 // pred_fallthru
      _
    // Predicated region
    $region38: #{_accumulate_impl.1} parent=1 // pred_check
      _
    $region39: #{_accumulate_impl.1} parent=1 // pred_check_branch
      %77 = sbr.rel (0) target = $region41
    $region40: #{_accumulate_impl.1} parent=1 // pred_region
      %79 = dma.done [#allocation7], 16
    $region41: #{_accumulate_impl.1} parent=1 // pred_fallthru
      _
    %80 = sfence
    %81 = vsyncpa [#allocation5], 1
    %82 = vsyncpa [#allocation6], 1
    %83 = vsyncpa [#allocation7], 1

</llo_original>
